<compile_context>
chip_gen: v5e
topology: v5e:2x2
jax: 0.10.0
libtpu: 0.0.40
codegen_flags: <defaults>
</compile_context>

<pallas_src>
import functools

import jax
import jax.numpy as jnp
from jax.experimental import pallas as pl
from jax.experimental.pallas import tpu as pltpu


def _round_up(n, m):
    return (n + m - 1) // m * m


def _vae_kernel(x_ref, eps_ref,
                w_enc_ref, b_enc_ref,
                w_mv_ref, b_mv_ref,
                w_dec_ref, b_dec_ref,
                w_dec2_ref, b_dec2_ref,
                xr_ref, kl_ref,
                *, z_size):
    x = x_ref[...]                                            # (TB, A*B) f32

    # ---- encode ----
    h = jnp.dot(x.astype(jnp.bfloat16), w_enc_ref[...],
                preferred_element_type=jnp.float32)
    h = jnp.maximum(h + b_enc_ref[...], 0.0)                  # relu, (TB, 400) f32

    # fused mu/logvar head: one matmul, slice the 2*z lanes afterwards
    mv = jnp.dot(h.astype(jnp.bfloat16), w_mv_ref[...],
                 preferred_element_type=jnp.float32) + b_mv_ref[...]   # (TB, 2z)
    mu = mv[:, :z_size]
    logvar = mv[:, z_size:]

    # ---- KL term (matches the PyTorch module: exp(logvar)^2) ----
    ev = jnp.exp(logvar)
    kl_terms = mu * mu + ev * ev - 1.0 - logvar
    kl_ref[...] = 0.5 * jnp.sum(kl_terms, axis=-1, keepdims=True)       # (TB, 1)

    # ---- reparameterize ----
    std = jnp.exp(0.5 * logvar)
    z = mu + eps_ref[...] * std                               # (TB, Z) f32

    # ---- decode ----
    hd = jnp.dot(z.astype(jnp.bfloat16), w_dec_ref[...],
                 preferred_element_type=jnp.float32)
    hd = jnp.maximum(hd + b_dec_ref[...], 0.0)                # relu, (TB, 400) f32
    logits = jnp.dot(hd.astype(jnp.bfloat16), w_dec2_ref[...],
                     preferred_element_type=jnp.float32) + b_dec2_ref[...]
    xr_ref[...] = jax.nn.sigmoid(logits)                      # (TB, A*B) f32


@jax.jit
def vae_forward(x, eps, params):
    """Fused VAE forward. Returns (x_reconstructed, kl_scalar)."""
    batch, d_in = x.shape
    z_size = eps.shape[1]
    hidden = params["w_enc"].shape[1]

    # Batch tile: sublane-aligned (>=8 rows); large batches tiled at 256 rows.
    TB = 256 if batch >= 256 else max(8, _round_up(batch, 8))
    padded = _round_up(batch, TB)
    if padded != batch:
        x = jnp.pad(x, ((0, padded - batch), (0, 0)))
        eps = jnp.pad(eps, ((0, padded - batch), (0, 0)))
    grid_n = padded // TB

    inputs = (
        x, eps,
        params["w_enc"], params["b_enc"],
        params["w_mv"], params["b_mv"],
        params["w_dec"], params["b_dec"],
        params["w_dec2"], params["b_dec2"],
    )

    def batch_tiled(shape):
        return pl.BlockSpec(shape, lambda i: (i, 0))

    def resident(shape):
        # Constant index_map -> weight/bias block stays VMEM-resident across
        # all grid steps (loaded from HBM exactly once).
        return pl.BlockSpec(shape, lambda i: (0, 0))

    in_specs = [
        batch_tiled((TB, d_in)),               # x
        batch_tiled((TB, z_size)),             # eps
        resident((d_in, hidden)),              # w_enc (bf16)
        resident((1, hidden)),                 # b_enc (f32)
        resident((hidden, 2 * z_size)),        # w_mv  (bf16, fused mu|var)
        resident((1, 2 * z_size)),             # b_mv  (f32)
        resident((z_size, hidden)),            # w_dec (bf16)
        resident((1, hidden)),                 # b_dec (f32)
        resident((hidden, d_in)),              # w_dec2 (bf16)
        resident((1, d_in)),                   # b_dec2 (f32)
    ]

    out_specs = (
        batch_tiled((TB, d_in)),               # x_reconstructed
        batch_tiled((TB, 1)),                  # per-row KL partials
    )

    x_r, kl_rows = pl.pallas_call(
        functools.partial(_vae_kernel, z_size=z_size),
        grid=(grid_n,),
        out_shape=(
            jax.ShapeDtypeStruct((padded, d_in), jnp.float32),
            jax.ShapeDtypeStruct((padded, 1), jnp.float32),
        ),
        in_specs=in_specs,
        out_specs=out_specs,
        compiler_params=pltpu.CompilerParams(
            dimension_semantics=("parallel",)),
    )(*inputs)

    # Drop padded rows; reduce per-row KL partials to the module's scalar KL.
    x_r = x_r[:batch]
    kl = jnp.sum(kl_rows[:batch, 0])
    return x_r, kl


def init_params(key, d_in, hidden, z_size):
    """Synthetic parameters with PyTorch nn.Linear init, stored as (in, out).

    Matmul weights are cast to bfloat16 (halves HBM->VMEM weight traffic;
    f32 accumulation happens on the MXU). Biases stay float32. The mu/var
    heads are pre-fused into a single (hidden, 2*z) weight."""
    keys = jax.random.split(key, 10)

    def linear(kw, kb, fan_in, fan_out):
        bound = 1.0 / jnp.sqrt(float(fan_in))
        w = jax.random.uniform(kw, (fan_in, fan_out), jnp.float32, -bound, bound)
        b = jax.random.uniform(kb, (1, fan_out), jnp.float32, -bound, bound)
        return w, b

    w_enc, b_enc = linear(keys[0], keys[1], d_in, hidden)
    w_mu, b_mu = linear(keys[2], keys[3], hidden, z_size)
    w_var, b_var = linear(keys[4], keys[5], hidden, z_size)
    w_dec, b_dec = linear(keys[6], keys[7], z_size, hidden)
    w_dec2, b_dec2 = linear(keys[8], keys[9], hidden, d_in)

    # Fuse mu / logvar projections: out[:, :z] = mu, out[:, z:] = logvar.
    w_mv = jnp.concatenate([w_mu, w_var], axis=1)
    b_mv = jnp.concatenate([b_mu, b_var], axis=1)

    bf16 = jnp.bfloat16
    return dict(
        w_enc=w_enc.astype(bf16), b_enc=b_enc,
        w_mv=w_mv.astype(bf16), b_mv=b_mv,
        w_dec=w_dec.astype(bf16), b_dec=b_dec,
        w_dec2=w_dec2.astype(bf16), b_dec2=b_dec2,
    )


if __name__ == "__main__":
    # Module params: A=16, B=16, z_size=8, channel=1 -> flattened input dim 256.
    A, B, z_size, hidden = 16, 16, 8, 400
    batch = 2
    d_in = A * B

    key = jax.random.PRNGKey(0)
    k_x, k_eps, k_params = jax.random.split(key, 3)

    # x is the flattened image batch in [0, 1], as the PyTorch forward expects.
    x = jax.random.uniform(k_x, (batch, d_in), jnp.float32, 0.0, 1.0)
    # eps plays the role of torch.randn_like(std) in reparameterize().
    eps = jax.random.normal(k_eps, (batch, z_size), jnp.float32)

    params = init_params(k_params, d_in, hidden, z_size)

    x_r, kl = vae_forward(x, eps, params)
    jax.block_until_ready((x_r, kl))

    assert x_r.shape == (batch, d_in)
    assert x_r.dtype == jnp.float32
    assert kl.shape == ()
    assert bool(jnp.all((x_r >= 0.0) & (x_r <= 1.0)))
    assert bool(jnp.isfinite(kl))

    print("KERNEL_OK")
</pallas_src>

<mosaic_0001>
module attributes {stable_mosaic.version = 11 : i64} {
  func.func @_vae_kernel(%arg0: i32, %arg1: memref<8x256xf32, #tpu.memory_space<vmem>>, %arg2: memref<8x8xf32, #tpu.memory_space<vmem>>, %arg3: memref<256x400xbf16, #tpu.memory_space<vmem>>, %arg4: memref<1x400xf32, #tpu.memory_space<vmem>>, %arg5: memref<400x16xbf16, #tpu.memory_space<vmem>>, %arg6: memref<1x16xf32, #tpu.memory_space<vmem>>, %arg7: memref<8x400xbf16, #tpu.memory_space<vmem>>, %arg8: memref<1x400xf32, #tpu.memory_space<vmem>>, %arg9: memref<400x256xbf16, #tpu.memory_space<vmem>>, %arg10: memref<1x256xf32, #tpu.memory_space<vmem>>, %arg11: memref<8x256xf32, #tpu.memory_space<vmem>>, %arg12: memref<8x1xf32, #tpu.memory_space<vmem>>) attributes {dimension_semantics = [#tpu.dimension_semantics<parallel>], iteration_bounds = array<i64: 1>, scalar_prefetch = 0 : i64, scratch_operands = 0 : i64, tpu.core_type = #tpu.core_type<tc>, window_params = [{transform_indices = @transform_0, window_bounds = array<i64: 8, 256>}, {transform_indices = @transform_1, window_bounds = array<i64: 8, 8>}, {pipeline_mode = #tpu.pipeline_mode<synchronous>, transform_indices = @transform_2, window_bounds = array<i64: 256, 400>}, {pipeline_mode = #tpu.pipeline_mode<synchronous>, transform_indices = @transform_3, window_bounds = array<i64: 1, 400>}, {pipeline_mode = #tpu.pipeline_mode<synchronous>, transform_indices = @transform_4, window_bounds = array<i64: 400, 16>}, {pipeline_mode = #tpu.pipeline_mode<synchronous>, transform_indices = @transform_5, window_bounds = array<i64: 1, 16>}, {pipeline_mode = #tpu.pipeline_mode<synchronous>, transform_indices = @transform_6, window_bounds = array<i64: 8, 400>}, {pipeline_mode = #tpu.pipeline_mode<synchronous>, transform_indices = @transform_7, window_bounds = array<i64: 1, 400>}, {pipeline_mode = #tpu.pipeline_mode<synchronous>, transform_indices = @transform_8, window_bounds = array<i64: 400, 256>}, {pipeline_mode = #tpu.pipeline_mode<synchronous>, transform_indices = @transform_9, window_bounds = array<i64: 1, 256>}, {transform_indices = @transform_10, window_bounds = array<i64: 8, 256>}, {transform_indices = @transform_11, window_bounds = array<i64: 8, 1>}]} {
    %c0 = arith.constant 0 : index
    %c0_0 = arith.constant 0 : index
    %0 = vector.load %arg1[%c0, %c0_0] : memref<8x256xf32, #tpu.memory_space<vmem>>, vector<8x256xf32>
    %1 = arith.truncf %0 : vector<8x256xf32> to vector<8x256xbf16>
    %c0_1 = arith.constant 0 : index
    %c0_2 = arith.constant 0 : index
    %2 = vector.load %arg3[%c0_1, %c0_2] : memref<256x400xbf16, #tpu.memory_space<vmem>>, vector<256x400xbf16>
    %cst = arith.constant dense<0.000000e+00> : vector<8x400xf32>
    %3 = tpu.matmul %1, %2, %cst {dimension_numbers = #tpu.dot_dimension_numbers<[1], [0], [0], [1], [0, 0, 1, 1], [], []>} : vector<8x256xbf16>, vector<256x400xbf16>, vector<8x400xf32> -> vector<8x400xf32>
    %c0_3 = arith.constant 0 : index
    %c0_4 = arith.constant 0 : index
    %4 = vector.load %arg4[%c0_3, %c0_4] : memref<1x400xf32, #tpu.memory_space<vmem>>, vector<1x400xf32>
    %5 = vector.broadcast %4 : vector<1x400xf32> to vector<8x400xf32>
    %6 = arith.addf %3, %5 : vector<8x400xf32>
    %cst_5 = arith.constant 0.000000e+00 : f32
    %7 = vector.broadcast %cst_5 : f32 to vector<8x400xf32>
    %8 = arith.maximumf %6, %7 : vector<8x400xf32>
    %9 = arith.truncf %8 : vector<8x400xf32> to vector<8x400xbf16>
    %c0_6 = arith.constant 0 : index
    %c0_7 = arith.constant 0 : index
    %10 = vector.load %arg5[%c0_6, %c0_7] : memref<400x16xbf16, #tpu.memory_space<vmem>>, vector<400x16xbf16>
    %cst_8 = arith.constant dense<0.000000e+00> : vector<8x16xf32>
    %11 = tpu.matmul %9, %10, %cst_8 {dimension_numbers = #tpu.dot_dimension_numbers<[1], [0], [0], [1], [0, 0, 1, 1], [], []>} : vector<8x400xbf16>, vector<400x16xbf16>, vector<8x16xf32> -> vector<8x16xf32>
    %c0_9 = arith.constant 0 : index
    %c0_10 = arith.constant 0 : index
    %12 = vector.load %arg6[%c0_9, %c0_10] : memref<1x16xf32, #tpu.memory_space<vmem>>, vector<1x16xf32>
    %13 = vector.broadcast %12 : vector<1x16xf32> to vector<8x16xf32>
    %14 = arith.addf %11, %13 : vector<8x16xf32>
    %15 = vector.extract_strided_slice %14 {offsets = [0, 0], sizes = [8, 8], strides = [1, 1]} : vector<8x16xf32> to vector<8x8xf32>
    %16 = vector.extract_strided_slice %14 {offsets = [0, 8], sizes = [8, 8], strides = [1, 1]} : vector<8x16xf32> to vector<8x8xf32>
    %17 = math.exp %16 : vector<8x8xf32>
    %18 = arith.mulf %15, %15 : vector<8x8xf32>
    %19 = arith.mulf %17, %17 : vector<8x8xf32>
    %20 = arith.addf %18, %19 : vector<8x8xf32>
    %cst_11 = arith.constant 1.000000e+00 : f32
    %21 = vector.broadcast %cst_11 : f32 to vector<8x8xf32>
    %22 = arith.subf %20, %21 : vector<8x8xf32>
    %23 = arith.subf %22, %16 : vector<8x8xf32>
    %cst_12 = arith.constant dense<0.000000e+00> : vector<8xf32>
    %24 = vector.multi_reduction <add>, %23, %cst_12 [1] : vector<8x8xf32> to vector<8xf32>
    %25 = vector.shape_cast %24 : vector<8xf32> to vector<8x1xf32>
    %cst_13 = arith.constant 5.000000e-01 : f32
    %26 = vector.broadcast %cst_13 : f32 to vector<8x1xf32>
    %27 = arith.mulf %26, %25 : vector<8x1xf32>
    %c0_14 = arith.constant 0 : index
    %c0_15 = arith.constant 0 : index
    %28 = vector.load %arg12[%c0_14, %c0_15] : memref<8x1xf32, #tpu.memory_space<vmem>>, vector<8x1xf32>
    tpu.vector_store %arg12[%c0_14, %c0_15], %27 {strides = array<i32>} : memref<8x1xf32, #tpu.memory_space<vmem>>, vector<8x1xf32>,
    %cst_16 = arith.constant 5.000000e-01 : f32
    %29 = vector.broadcast %cst_16 : f32 to vector<8x8xf32>
    %30 = arith.mulf %29, %16 : vector<8x8xf32>
    %31 = math.exp %30 : vector<8x8xf32>
    %c0_17 = arith.constant 0 : index
    %c0_18 = arith.constant 0 : index
    %32 = vector.load %arg2[%c0_17, %c0_18] : memref<8x8xf32, #tpu.memory_space<vmem>>, vector<8x8xf32>
    %33 = arith.mulf %32, %31 : vector<8x8xf32>
    %34 = arith.addf %15, %33 : vector<8x8xf32>
    %35 = arith.truncf %34 : vector<8x8xf32> to vector<8x8xbf16>
    %c0_19 = arith.constant 0 : index
    %c0_20 = arith.constant 0 : index
    %36 = vector.load %arg7[%c0_19, %c0_20] : memref<8x400xbf16, #tpu.memory_space<vmem>>, vector<8x400xbf16>
    %cst_21 = arith.constant dense<0.000000e+00> : vector<8x400xf32>
    %37 = tpu.matmul %35, %36, %cst_21 {dimension_numbers = #tpu.dot_dimension_numbers<[1], [0], [0], [1], [0, 0, 1, 1], [], []>} : vector<8x8xbf16>, vector<8x400xbf16>, vector<8x400xf32> -> vector<8x400xf32>
    %c0_22 = arith.constant 0 : index
    %c0_23 = arith.constant 0 : index
    %38 = vector.load %arg8[%c0_22, %c0_23] : memref<1x400xf32, #tpu.memory_space<vmem>>, vector<1x400xf32>
    %39 = vector.broadcast %38 : vector<1x400xf32> to vector<8x400xf32>
    %40 = arith.addf %37, %39 : vector<8x400xf32>
    %cst_24 = arith.constant 0.000000e+00 : f32
    %41 = vector.broadcast %cst_24 : f32 to vector<8x400xf32>
    %42 = arith.maximumf %40, %41 : vector<8x400xf32>
    %43 = arith.truncf %42 : vector<8x400xf32> to vector<8x400xbf16>
    %c0_25 = arith.constant 0 : index
    %c0_26 = arith.constant 0 : index
    %44 = vector.load %arg9[%c0_25, %c0_26] : memref<400x256xbf16, #tpu.memory_space<vmem>>, vector<400x256xbf16>
    %cst_27 = arith.constant dense<0.000000e+00> : vector<8x256xf32>
    %45 = tpu.matmul %43, %44, %cst_27 {dimension_numbers = #tpu.dot_dimension_numbers<[1], [0], [0], [1], [0, 0, 1, 1], [], []>} : vector<8x400xbf16>, vector<400x256xbf16>, vector<8x256xf32> -> vector<8x256xf32>
    %c0_28 = arith.constant 0 : index
    %c0_29 = arith.constant 0 : index
    %46 = vector.load %arg10[%c0_28, %c0_29] : memref<1x256xf32, #tpu.memory_space<vmem>>, vector<1x256xf32>
    %47 = vector.broadcast %46 : vector<1x256xf32> to vector<8x256xf32>
    %48 = arith.addf %45, %47 : vector<8x256xf32>
    %49 = arith.negf %48 : vector<8x256xf32>
    %50 = math.exp %49 : vector<8x256xf32>
    %cst_30 = arith.constant 1.000000e+00 : f32
    %51 = vector.broadcast %cst_30 : f32 to vector<8x256xf32>
    %52 = arith.addf %51, %50 : vector<8x256xf32>
    %53 = arith.divf %51, %52 : vector<8x256xf32>
    %c0_31 = arith.constant 0 : index
    %c0_32 = arith.constant 0 : index
    %54 = vector.load %arg11[%c0_31, %c0_32] : memref<8x256xf32, #tpu.memory_space<vmem>>, vector<8x256xf32>
    tpu.vector_store %arg11[%c0_31, %c0_32], %53 {strides = array<i32>} : memref<8x256xf32, #tpu.memory_space<vmem>>, vector<8x256xf32>,
    return
  }
  func.func @transform_0(%arg0: i32) -> (i32, i32) {
    %c0_i32 = arith.constant 0 : i32
    %c0_i32_0 = arith.constant 0 : i32
    return %arg0, %c0_i32 : i32, i32
  }
  func.func @transform_1(%arg0: i32) -> (i32, i32) {
    %c0_i32 = arith.constant 0 : i32
    %c0_i32_0 = arith.constant 0 : i32
    return %arg0, %c0_i32 : i32, i32
  }
  func.func @transform_2(%arg0: i32) -> (i32, i32) {
    %c0_i32 = arith.constant 0 : i32
    %c0_i32_0 = arith.constant 0 : i32
    %c0_i32_1 = arith.constant 0 : i32
    return %c0_i32, %c0_i32_0 : i32, i32
  }
  func.func @transform_3(%arg0: i32) -> (i32, i32) {
    %c0_i32 = arith.constant 0 : i32
    %c0_i32_0 = arith.constant 0 : i32
    %c0_i32_1 = arith.constant 0 : i32
    return %c0_i32, %c0_i32_0 : i32, i32
  }
  func.func @transform_4(%arg0: i32) -> (i32, i32) {
    %c0_i32 = arith.constant 0 : i32
    %c0_i32_0 = arith.constant 0 : i32
    %c0_i32_1 = arith.constant 0 : i32
    return %c0_i32, %c0_i32_0 : i32, i32
  }
  func.func @transform_5(%arg0: i32) -> (i32, i32) {
    %c0_i32 = arith.constant 0 : i32
    %c0_i32_0 = arith.constant 0 : i32
    %c0_i32_1 = arith.constant 0 : i32
    return %c0_i32, %c0_i32_0 : i32, i32
  }
  func.func @transform_6(%arg0: i32) -> (i32, i32) {
    %c0_i32 = arith.constant 0 : i32
    %c0_i32_0 = arith.constant 0 : i32
    %c0_i32_1 = arith.constant 0 : i32
    return %c0_i32, %c0_i32_0 : i32, i32
  }
  func.func @transform_7(%arg0: i32) -> (i32, i32) {
    %c0_i32 = arith.constant 0 : i32
    %c0_i32_0 = arith.constant 0 : i32
    %c0_i32_1 = arith.constant 0 : i32
    return %c0_i32, %c0_i32_0 : i32, i32
  }
  func.func @transform_8(%arg0: i32) -> (i32, i32) {
    %c0_i32 = arith.constant 0 : i32
    %c0_i32_0 = arith.constant 0 : i32
    %c0_i32_1 = arith.constant 0 : i32
    return %c0_i32, %c0_i32_0 : i32, i32
  }
  func.func @transform_9(%arg0: i32) -> (i32, i32) {
    %c0_i32 = arith.constant 0 : i32
    %c0_i32_0 = arith.constant 0 : i32
    %c0_i32_1 = arith.constant 0 : i32
    return %c0_i32, %c0_i32_0 : i32, i32
  }
  func.func @transform_10(%arg0: i32) -> (i32, i32) {
    %c0_i32 = arith.constant 0 : i32
    %c0_i32_0 = arith.constant 0 : i32
    return %arg0, %c0_i32 : i32, i32
  }
  func.func @transform_11(%arg0: i32) -> (i32, i32) {
    %c0_i32 = arith.constant 0 : i32
    %c0_i32_0 = arith.constant 0 : i32
    return %arg0, %c0_i32 : i32, i32
  }
}

</mosaic_0001>

<llo_original>
// kernel: vae_forward.1
$region0: #{vae_forward.1}
  #allocation0 [shape = 'u32[]', space=smem, size = 0x4, offset = 0x4, fixed_abs, tag = 'smem constant byte address 0x4 - core index']
  #allocation1 [shape = 'u32[72,128]{1,0:T(1,128)}', space=vmem, size = 0x9000, scoped, tag = 'internal scratch']
  %s0 = inlined_call_operand.vmem [shape: f32[8,256], index: 0, kind: input, shape index: {}]
  %s1 = inlined_call_operand.vmem [shape: f32[8,8], index: 1, kind: input, shape index: {}]
  %s2 = inlined_call_operand.vmem [shape: bf16[256,400], index: 2, kind: input, shape index: {}]
  %s3 = inlined_call_operand.vmem [shape: f32[1,400], index: 3, kind: input, shape index: {}]
  %s4 = inlined_call_operand.vmem [shape: bf16[400,16], index: 4, kind: input, shape index: {}]
  %s5 = inlined_call_operand.vmem [shape: f32[1,16], index: 5, kind: input, shape index: {}]
  %s6 = inlined_call_operand.vmem [shape: bf16[8,400], index: 6, kind: input, shape index: {}]
  %s7 = inlined_call_operand.vmem [shape: f32[1,400], index: 7, kind: input, shape index: {}]
  %s8 = inlined_call_operand.vmem [shape: bf16[400,256], index: 8, kind: input, shape index: {}]
  %s9 = inlined_call_operand.vmem [shape: f32[1,256], index: 9, kind: input, shape index: {}]
  %s10 = inlined_call_operand.vmem [shape: f32[8,256], index: 10, kind: output, shape index: {0}]
  %s11 = inlined_call_operand.vmem [shape: f32[8,1], index: 11, kind: output, shape index: {1}]
  %12 = xla_tuple %s10, %s11
  %s13 = sld [smem:[#allocation0]]
  $region58: #{vae_forward.1} parent=0
    _
  %s15 = ssub.s32 1, %s13
  %s16 = scalar_select 0, %s15, %s13
  // Predicated region
  $region2: #{vae_forward.1} parent=0 // pred_check
    _
  $region3: #{vae_forward.1} parent=0 // pred_check_branch
    %18 = sbr.rel (0) target = $region5
  $region4: #{vae_forward.1} parent=0 // pred_region
    _
  $region5: #{vae_forward.1} parent=0 // pred_fallthru
    _
  // Predicated region
  $region6: #{vae_forward.1} parent=0 // pred_check
    _
  $region7: #{vae_forward.1} parent=0 // pred_check_branch
    %20 = sbr.rel (0) target = $region9
  $region8: #{vae_forward.1} parent=0 // pred_region
    _
  $region9: #{vae_forward.1} parent=0 // pred_fallthru
    _
  // Predicated region
  $region10: #{vae_forward.1} parent=0 // pred_check
    _
  $region11: #{vae_forward.1} parent=0 // pred_check_branch
    %22 = sbr.rel (0) target = $region13
  $region12: #{vae_forward.1} parent=0 // pred_region
    _
  $region13: #{vae_forward.1} parent=0 // pred_fallthru
    _
  // Predicated region
  $region14: #{vae_forward.1} parent=0 // pred_check
    _
  $region15: #{vae_forward.1} parent=0 // pred_check_branch
    %24 = sbr.rel (0) target = $region17
  $region16: #{vae_forward.1} parent=0 // pred_region
    _
  $region17: #{vae_forward.1} parent=0 // pred_fallthru
    _
  // Predicated region
  $region18: #{vae_forward.1} parent=0 // pred_check
    _
  $region19: #{vae_forward.1} parent=0 // pred_check_branch
    %26 = sbr.rel (0) target = $region21
  $region20: #{vae_forward.1} parent=0 // pred_region
    _
  $region21: #{vae_forward.1} parent=0 // pred_fallthru
    _
  // Predicated region
  $region22: #{vae_forward.1} parent=0 // pred_check
    _
  $region23: #{vae_forward.1} parent=0 // pred_check_branch
    %28 = sbr.rel (0) target = $region25
  $region24: #{vae_forward.1} parent=0 // pred_region
    _
  $region25: #{vae_forward.1} parent=0 // pred_fallthru
    _
  // Predicated region
  $region26: #{vae_forward.1} parent=0 // pred_check
    _
  $region27: #{vae_forward.1} parent=0 // pred_check_branch
    %30 = sbr.rel (0) target = $region29
  $region28: #{vae_forward.1} parent=0 // pred_region
    _
  $region29: #{vae_forward.1} parent=0 // pred_fallthru
    _
  // Predicated region
  $region30: #{vae_forward.1} parent=0 // pred_check
    _
  $region31: #{vae_forward.1} parent=0 // pred_check_branch
    %32 = sbr.rel (0) target = $region33
  $region32: #{vae_forward.1} parent=0 // pred_region
    _
  $region33: #{vae_forward.1} parent=0 // pred_fallthru
    _
  // Predicated region
  $region34: #{vae_forward.1} parent=0 // pred_check
    _
  $region35: #{vae_forward.1} parent=0 // pred_check_branch
    %34 = sbr.rel (0) target = $region37
  $region36: #{vae_forward.1} parent=0 // pred_region
    _
  $region37: #{vae_forward.1} parent=0 // pred_fallthru
    _
  // Predicated region
  $region38: #{vae_forward.1} parent=0 // pred_check
    _
  $region39: #{vae_forward.1} parent=0 // pred_check_branch
    %36 = sbr.rel (0) target = $region41
  $region40: #{vae_forward.1} parent=0 // pred_region
    _
  $region41: #{vae_forward.1} parent=0 // pred_fallthru
    _
  %v38 = vld [vmem:[%s0] sm:$0xff]
  %v39 = vld [vmem:[%s0 + $0x8] sm:$0xff]
  %v40 = vpack.c.bf16 %v38, %v38
  %v41 = vpack.c.bf16 %v39, %v39
  %v42 = vld [vmem:[%s2] sm:$0xff]
  %v43 = vld [vmem:[%s2 + $0x8] sm:$0xff]
  %v44 = vld [vmem:[%s2 + $0x10] sm:$0xff]
  %v45 = vld [vmem:[%s2 + $0x18] sm:$0xff]
  %v46 = vld [vmem:[%s2 + $0x20] sm:$0xff]
  %v47 = vld [vmem:[%s2 + $0x28] sm:$0xff]
  %v48 = vld [vmem:[%s2 + $0x30] sm:$0xff]
  %v49 = vld [vmem:[%s2 + $0x38] sm:$0xff]
  %v50 = vld [vmem:[%s2 + $0x40] sm:$0xff]
  %v51 = vld [vmem:[%s2 + $0x48] sm:$0xff]
  %v52 = vld [vmem:[%s2 + $0x50] sm:$0xff]
  %v53 = vld [vmem:[%s2 + $0x58] sm:$0xff]
  %v54 = vld [vmem:[%s2 + $0x60] sm:$0xff]
  %v55 = vld [vmem:[%s2 + $0x68] sm:$0xff]
  %v56 = vld [vmem:[%s2 + $0x70] sm:$0xff]
  %v57 = vld [vmem:[%s2 + $0x78] sm:$0xff]
  %v58 = vld [vmem:[%s2 + $0x80] sm:$0xff]
  %v59 = vld [vmem:[%s2 + $0x88] sm:$0xff]
  %v60 = vld [vmem:[%s2 + $0x90] sm:$0xff]
  %v61 = vld [vmem:[%s2 + $0x98] sm:$0xff]
  %v62 = vld [vmem:[%s2 + $0xa0] sm:$0xff]
  %v63 = vld [vmem:[%s2 + $0xa8] sm:$0xff]
  %v64 = vld [vmem:[%s2 + $0xb0] sm:$0xff]
  %v65 = vld [vmem:[%s2 + $0xb8] sm:$0xff]
  %v66 = vld [vmem:[%s2 + $0xc0] sm:$0xff]
  %v67 = vld [vmem:[%s2 + $0xc8] sm:$0xff]
  %v68 = vld [vmem:[%s2 + $0xd0] sm:$0xff]
  %v69 = vld [vmem:[%s2 + $0xd8] sm:$0xff]
  %v70 = vld [vmem:[%s2 + $0xe0] sm:$0xff]
  %v71 = vld [vmem:[%s2 + $0xe8] sm:$0xff]
  %v72 = vld [vmem:[%s2 + $0xf0] sm:$0xff]
  %v73 = vld [vmem:[%s2 + $0xf8] sm:$0xff]
  %v74 = vld [vmem:[%s2 + $0x100] sm:$0xff]
  %v75 = vld [vmem:[%s2 + $0x108] sm:$0xff]
  %v76 = vld [vmem:[%s2 + $0x110] sm:$0xff]
  %v77 = vld [vmem:[%s2 + $0x118] sm:$0xff]
  %v78 = vld [vmem:[%s2 + $0x120] sm:$0xff]
  %v79 = vld [vmem:[%s2 + $0x128] sm:$0xff]
  %v80 = vld [vmem:[%s2 + $0x130] sm:$0xff]
  %v81 = vld [vmem:[%s2 + $0x138] sm:$0xff]
  %v82 = vld [vmem:[%s2 + $0x140] sm:$0xff]
  %v83 = vld [vmem:[%s2 + $0x148] sm:$0xff]
  %v84 = vld [vmem:[%s2 + $0x150] sm:$0xff]
  %v85 = vld [vmem:[%s2 + $0x158] sm:$0xff]
  %v86 = vld [vmem:[%s2 + $0x160] sm:$0xff]
  %v87 = vld [vmem:[%s2 + $0x168] sm:$0xff]
  %v88 = vld [vmem:[%s2 + $0x170] sm:$0xff]
  %v89 = vld [vmem:[%s2 + $0x178] sm:$0xff]
  %v90 = vld [vmem:[%s2 + $0x180] sm:$0xff]
  %v91 = vld [vmem:[%s2 + $0x188] sm:$0xff]
  %v92 = vld [vmem:[%s2 + $0x190] sm:$0xff]
  %v93 = vld [vmem:[%s2 + $0x198] sm:$0xff]
  %v94 = vld [vmem:[%s2 + $0x1a0] sm:$0xff]
  %v95 = vld [vmem:[%s2 + $0x1a8] sm:$0xff]
  %v96 = vld [vmem:[%s2 + $0x1b0] sm:$0xff]
  %v97 = vld [vmem:[%s2 + $0x1b8] sm:$0xff]
  %v98 = vld [vmem:[%s2 + $0x1c0] sm:$0xff]
  %v99 = vld [vmem:[%s2 + $0x1c8] sm:$0xff]
  %v100 = vld [vmem:[%s2 + $0x1d0] sm:$0xff]
  %v101 = vld [vmem:[%s2 + $0x1d8] sm:$0xff]
  %v102 = vld [vmem:[%s2 + $0x1e0] sm:$0xff]
  %v103 = vld [vmem:[%s2 + $0x1e8] sm:$0xff]
  %v104 = vld [vmem:[%s2 + $0x1f0] sm:$0xff]
  %v105 = vld [vmem:[%s2 + $0x1f8] sm:$0xff]
  %v106 = vld [vmem:[%s3] sm:$0xf]
  %v108 = vperm.slane %v106, 0
  %v109 = vperm.slane %v106, 1
  %v110 = vperm.slane %v106, 2
  %v111 = vperm.slane %v106, 3
  %v180 = vunpack.c.l.b16 %v42
  %v181 = vunpack.c.h.b16 %v42
  %v182 = vunpack.c.l.b16 %v43
  %v183 = vunpack.c.h.b16 %v43
  %v184 = vunpack.c.l.b16 %v44
  %v185 = vunpack.c.h.b16 %v44
  %v186 = vunpack.c.l.b16 %v45
  %v187 = vunpack.c.h.b16 %v45
  %v188 = vunpack.c.l.b16 %v46
  %v189 = vunpack.c.h.b16 %v46
  %v190 = vunpack.c.l.b16 %v47
  %v191 = vunpack.c.h.b16 %v47
  %v192 = vunpack.c.l.b16 %v48
  %v193 = vunpack.c.h.b16 %v48
  %v194 = vunpack.c.l.b16 %v49
  %v195 = vunpack.c.h.b16 %v49
  %v196 = vunpack.c.l.b16 %v50
  %v197 = vunpack.c.h.b16 %v50
  %v198 = vunpack.c.l.b16 %v51
  %v199 = vunpack.c.h.b16 %v51
  %v200 = vunpack.c.l.b16 %v52
  %v201 = vunpack.c.h.b16 %v52
  %v202 = vunpack.c.l.b16 %v53
  %v203 = vunpack.c.h.b16 %v53
  %v204 = vunpack.c.l.b16 %v54
  %v205 = vunpack.c.h.b16 %v54
  %v206 = vunpack.c.l.b16 %v55
  %v207 = vunpack.c.h.b16 %v55
  %v208 = vunpack.c.l.b16 %v56
  %v209 = vunpack.c.h.b16 %v56
  %v210 = vunpack.c.l.b16 %v57
  %v211 = vunpack.c.h.b16 %v57
  %v212 = vunpack.c.l.b16 %v58
  %v213 = vunpack.c.h.b16 %v58
  %v214 = vunpack.c.l.b16 %v59
  %v215 = vunpack.c.h.b16 %v59
  %v216 = vunpack.c.l.b16 %v60
  %v217 = vunpack.c.h.b16 %v60
  %v218 = vunpack.c.l.b16 %v61
  %v219 = vunpack.c.h.b16 %v61
  %v220 = vunpack.c.l.b16 %v62
  %v221 = vunpack.c.h.b16 %v62
  %v222 = vunpack.c.l.b16 %v63
  %v223 = vunpack.c.h.b16 %v63
  %v224 = vunpack.c.l.b16 %v64
  %v225 = vunpack.c.h.b16 %v64
  %v226 = vunpack.c.l.b16 %v65
  %v227 = vunpack.c.h.b16 %v65
  %v228 = vunpack.c.l.b16 %v66
  %v229 = vunpack.c.h.b16 %v66
  %v230 = vunpack.c.l.b16 %v67
  %v231 = vunpack.c.h.b16 %v67
  %v232 = vunpack.c.l.b16 %v68
  %v233 = vunpack.c.h.b16 %v68
  %v234 = vunpack.c.l.b16 %v69
  %v235 = vunpack.c.h.b16 %v69
  %v236 = vunpack.c.l.b16 %v70
  %v237 = vunpack.c.h.b16 %v70
  %v238 = vunpack.c.l.b16 %v71
  %v239 = vunpack.c.h.b16 %v71
  %v240 = vunpack.c.l.b16 %v72
  %v241 = vunpack.c.h.b16 %v72
  %v242 = vunpack.c.l.b16 %v73
  %v243 = vunpack.c.h.b16 %v73
  %v244 = vunpack.c.l.b16 %v74
  %v245 = vunpack.c.h.b16 %v74
  %v246 = vunpack.c.l.b16 %v75
  %v247 = vunpack.c.h.b16 %v75
  %v248 = vunpack.c.l.b16 %v76
  %v249 = vunpack.c.h.b16 %v76
  %v250 = vunpack.c.l.b16 %v77
  %v251 = vunpack.c.h.b16 %v77
  %v252 = vunpack.c.l.b16 %v78
  %v253 = vunpack.c.h.b16 %v78
  %v254 = vunpack.c.l.b16 %v79
  %v255 = vunpack.c.h.b16 %v79
  %v256 = vunpack.c.l.b16 %v80
  %v257 = vunpack.c.h.b16 %v80
  %v258 = vunpack.c.l.b16 %v81
  %v259 = vunpack.c.h.b16 %v81
  %v260 = vunpack.c.l.b16 %v82
  %v261 = vunpack.c.h.b16 %v82
  %v262 = vunpack.c.l.b16 %v83
  %v263 = vunpack.c.h.b16 %v83
  %v264 = vunpack.c.l.b16 %v84
  %v265 = vunpack.c.h.b16 %v84
  %v266 = vunpack.c.l.b16 %v85
  %v267 = vunpack.c.h.b16 %v85
  %v268 = vunpack.c.l.b16 %v86
  %v269 = vunpack.c.h.b16 %v86
  %v270 = vunpack.c.l.b16 %v87
  %v271 = vunpack.c.h.b16 %v87
  %v272 = vunpack.c.l.b16 %v88
  %v273 = vunpack.c.h.b16 %v88
  %v274 = vunpack.c.l.b16 %v89
  %v275 = vunpack.c.h.b16 %v89
  %v276 = vunpack.c.l.b16 %v90
  %v277 = vunpack.c.h.b16 %v90
  %v278 = vunpack.c.l.b16 %v91
  %v279 = vunpack.c.h.b16 %v91
  %v280 = vunpack.c.l.b16 %v92
  %v281 = vunpack.c.h.b16 %v92
  %v282 = vunpack.c.l.b16 %v93
  %v283 = vunpack.c.h.b16 %v93
  %v284 = vunpack.c.l.b16 %v94
  %v285 = vunpack.c.h.b16 %v94
  %v286 = vunpack.c.l.b16 %v95
  %v287 = vunpack.c.h.b16 %v95
  %v288 = vunpack.c.l.b16 %v96
  %v289 = vunpack.c.h.b16 %v96
  %v290 = vunpack.c.l.b16 %v97
  %v291 = vunpack.c.h.b16 %v97
  %v292 = vunpack.c.l.b16 %v98
  %v293 = vunpack.c.h.b16 %v98
  %v294 = vunpack.c.l.b16 %v99
  %v295 = vunpack.c.h.b16 %v99
  %v296 = vunpack.c.l.b16 %v100
  %v297 = vunpack.c.h.b16 %v100
  %v298 = vunpack.c.l.b16 %v101
  %v299 = vunpack.c.h.b16 %v101
  %v300 = vunpack.c.l.b16 %v102
  %v301 = vunpack.c.h.b16 %v102
  %v302 = vunpack.c.l.b16 %v103
  %v303 = vunpack.c.h.b16 %v103
  %v304 = vunpack.c.l.b16 %v104
  %v305 = vunpack.c.h.b16 %v104
  %v306 = vunpack.c.l.b16 %v105
  %v307 = vunpack.c.h.b16 %v105
  %v308 = vpack.c.b16 %v184, %v180
  %v309 = vpack.c.b16 %v185, %v181
  %v310 = vpack.c.b16 %v186, %v182
  %v311 = vpack.c.b16 %v187, %v183
  %v312 = vpack.c.b16 %v192, %v188
  %v313 = vpack.c.b16 %v193, %v189
  %v314 = vpack.c.b16 %v194, %v190
  %v315 = vpack.c.b16 %v195, %v191
  %v316 = vpack.c.b16 %v200, %v196
  %v317 = vpack.c.b16 %v201, %v197
  %v318 = vpack.c.b16 %v202, %v198
  %v319 = vpack.c.b16 %v203, %v199
  %v320 = vpack.c.b16 %v208, %v204
  %v321 = vpack.c.b16 %v209, %v205
  %v322 = vpack.c.b16 %v210, %v206
  %v323 = vpack.c.b16 %v211, %v207
  %v324 = vpack.c.b16 %v216, %v212
  %v325 = vpack.c.b16 %v217, %v213
  %v326 = vpack.c.b16 %v218, %v214
  %v327 = vpack.c.b16 %v219, %v215
  %v328 = vpack.c.b16 %v224, %v220
  %v329 = vpack.c.b16 %v225, %v221
  %v330 = vpack.c.b16 %v226, %v222
  %v331 = vpack.c.b16 %v227, %v223
  %v332 = vpack.c.b16 %v232, %v228
  %v333 = vpack.c.b16 %v233, %v229
  %v334 = vpack.c.b16 %v234, %v230
  %v335 = vpack.c.b16 %v235, %v231
  %v336 = vpack.c.b16 %v240, %v236
  %v337 = vpack.c.b16 %v241, %v237
  %v338 = vpack.c.b16 %v242, %v238
  %v339 = vpack.c.b16 %v243, %v239
  %v340 = vpack.c.b16 %v248, %v244
  %v341 = vpack.c.b16 %v249, %v245
  %v342 = vpack.c.b16 %v250, %v246
  %v343 = vpack.c.b16 %v251, %v247
  %v344 = vpack.c.b16 %v256, %v252
  %v345 = vpack.c.b16 %v257, %v253
  %v346 = vpack.c.b16 %v258, %v254
  %v347 = vpack.c.b16 %v259, %v255
  %v348 = vpack.c.b16 %v264, %v260
  %v349 = vpack.c.b16 %v265, %v261
  %v350 = vpack.c.b16 %v266, %v262
  %v351 = vpack.c.b16 %v267, %v263
  %v352 = vpack.c.b16 %v272, %v268
  %v353 = vpack.c.b16 %v273, %v269
  %v354 = vpack.c.b16 %v274, %v270
  %v355 = vpack.c.b16 %v275, %v271
  %v356 = vpack.c.b16 %v280, %v276
  %v357 = vpack.c.b16 %v281, %v277
  %v358 = vpack.c.b16 %v282, %v278
  %v359 = vpack.c.b16 %v283, %v279
  %v360 = vpack.c.b16 %v288, %v284
  %v361 = vpack.c.b16 %v289, %v285
  %v362 = vpack.c.b16 %v290, %v286
  %v363 = vpack.c.b16 %v291, %v287
  %v364 = vpack.c.b16 %v296, %v292
  %v365 = vpack.c.b16 %v297, %v293
  %v366 = vpack.c.b16 %v298, %v294
  %v367 = vpack.c.b16 %v299, %v295
  %v368 = vpack.c.b16 %v304, %v300
  %v369 = vpack.c.b16 %v305, %v301
  %v370 = vpack.c.b16 %v306, %v302
  %v371 = vpack.c.b16 %v307, %v303
  %436 = vmatpush.bf16.msra.mxu0 %v336
  %437 = vmatpush.bf16.msra.mxu0 %v332
  %438 = vmatpush.bf16.msra.mxu0 %v328
  %439 = vmatpush.bf16.msra.mxu0 %v324
  %440 = vmatpush.bf16.msra.mxu0 %v320
  %441 = vmatpush.bf16.msra.mxu0 %v316
  %442 = vmatpush.bf16.msra.mxu0 %v312
  %443 = vmatpush.bf16.msra.mxu0 %v308
  %444 = vmatmul.bf16.gmra.mxu0 %v40
  %v445 = vpop.f32.mrf.mxu0
  %v446 = vadd.f32 %v108, %v445
  %v447 = vpop.f32.mrf.mxu0
  %448 = vdwg.mxu0
  %449 = vmatpush.bf16.msra.mxu0 %v368
  %450 = vmatpush.bf16.msra.mxu0 %v364
  %451 = vmatpush.bf16.msra.mxu0 %v360
  %452 = vmatpush.bf16.msra.mxu0 %v356
  %453 = vmatpush.bf16.msra.mxu0 %v352
  %454 = vmatpush.bf16.msra.mxu0 %v348
  %455 = vmatpush.bf16.msra.mxu0 %v344
  %456 = vmatpush.bf16.msra.mxu0 %v340
  %457 = vmatmul.bf16.gmra.mxu0 %v41
  %v458 = vpop.f32.mrf.mxu0
  %v459 = vadd.f32 %v446, %v458
  %v460 = vpop.f32.mrf.mxu0
  %461 = vdwg.mxu0
  %462 = vmatpush.bf16.msra.mxu0 %v337
  %463 = vmatpush.bf16.msra.mxu0 %v333
  %464 = vmatpush.bf16.msra.mxu0 %v329
  %465 = vmatpush.bf16.msra.mxu0 %v325
  %466 = vmatpush.bf16.msra.mxu0 %v321
  %467 = vmatpush.bf16.msra.mxu0 %v317
  %468 = vmatpush.bf16.msra.mxu0 %v313
  %469 = vmatpush.bf16.msra.mxu0 %v309
  %470 = vmatmul.bf16.gmra.mxu0 %v40
  %v471 = vpop.f32.mrf.mxu0
  %v472 = vadd.f32 %v109, %v471
  %v473 = vpop.f32.mrf.mxu0
  %474 = vdwg.mxu0
  %475 = vmatpush.bf16.msra.mxu0 %v369
  %476 = vmatpush.bf16.msra.mxu0 %v365
  %477 = vmatpush.bf16.msra.mxu0 %v361
  %478 = vmatpush.bf16.msra.mxu0 %v357
  %479 = vmatpush.bf16.msra.mxu0 %v353
  %480 = vmatpush.bf16.msra.mxu0 %v349
  %481 = vmatpush.bf16.msra.mxu0 %v345
  %482 = vmatpush.bf16.msra.mxu0 %v341
  %483 = vmatmul.bf16.gmra.mxu0 %v41
  %v484 = vpop.f32.mrf.mxu0
  %v485 = vadd.f32 %v472, %v484
  %v486 = vpop.f32.mrf.mxu0
  %487 = vdwg.mxu0
  %488 = vmatpush.bf16.msra.mxu0 %v338
  %489 = vmatpush.bf16.msra.mxu0 %v334
  %490 = vmatpush.bf16.msra.mxu0 %v330
  %491 = vmatpush.bf16.msra.mxu0 %v326
  %492 = vmatpush.bf16.msra.mxu0 %v322
  %493 = vmatpush.bf16.msra.mxu0 %v318
  %494 = vmatpush.bf16.msra.mxu0 %v314
  %495 = vmatpush.bf16.msra.mxu0 %v310
  %496 = vmatmul.bf16.gmra.mxu0 %v40
  %v497 = vpop.f32.mrf.mxu0
  %v498 = vadd.f32 %v110, %v497
  %v499 = vpop.f32.mrf.mxu0
  %500 = vdwg.mxu0
  %501 = vmatpush.bf16.msra.mxu0 %v370
  %502 = vmatpush.bf16.msra.mxu0 %v366
  %503 = vmatpush.bf16.msra.mxu0 %v362
  %504 = vmatpush.bf16.msra.mxu0 %v358
  %505 = vmatpush.bf16.msra.mxu0 %v354
  %506 = vmatpush.bf16.msra.mxu0 %v350
  %507 = vmatpush.bf16.msra.mxu0 %v346
  %508 = vmatpush.bf16.msra.mxu0 %v342
  %509 = vmatmul.bf16.gmra.mxu0 %v41
  %v510 = vpop.f32.mrf.mxu0
  %v511 = vadd.f32 %v498, %v510
  %v512 = vpop.f32.mrf.mxu0
  %513 = vdwg.mxu0
  %514 = vmatpush.bf16.msra.mxu0 %v339
  %515 = vmatpush.bf16.msra.mxu0 %v335
  %516 = vmatpush.bf16.msra.mxu0 %v331
  %517 = vmatpush.bf16.msra.mxu0 %v327
  %518 = vmatpush.bf16.msra.mxu0 %v323
  %519 = vmatpush.bf16.msra.mxu0 %v319
  %520 = vmatpush.bf16.msra.mxu0 %v315
  %521 = vmatpush.bf16.msra.mxu0 %v311
  %522 = vmatmul.bf16.gmra.mxu0 %v40
  %v523 = vpop.f32.mrf.mxu0
  %v524 = vadd.f32 %v111, %v523
  %v525 = vpop.f32.mrf.mxu0
  %526 = vdwg.mxu0
  %527 = vmatpush.bf16.msra.mxu0 %v371
  %528 = vmatpush.bf16.msra.mxu0 %v367
  %529 = vmatpush.bf16.msra.mxu0 %v363
  %530 = vmatpush.bf16.msra.mxu0 %v359
  %531 = vmatpush.bf16.msra.mxu0 %v355
  %532 = vmatpush.bf16.msra.mxu0 %v351
  %533 = vmatpush.bf16.msra.mxu0 %v347
  %534 = vmatpush.bf16.msra.mxu0 %v343
  %535 = vmatmul.bf16.gmra.mxu0 %v41
  %v536 = vpop.f32.mrf.mxu0
  %v537 = vadd.f32 %v524, %v536
  %v538 = vpop.f32.mrf.mxu0
  %539 = vdwg.mxu0
  %v540 = vmax.f32 %v459, 0.0
  %v541 = vmax.f32 %v485, 0.0
  %v542 = vmax.f32 %v511, 0.0
  %v543 = vmax.f32 %v537, 0.0
  %v544 = vpack.c.bf16 %v540, %v540
  %v545 = vpack.c.bf16 %v541, %v541
  %v546 = vpack.c.bf16 %v542, %v542
  %v547 = vpack.c.bf16 %v543, %v543
  %v548 = vld [vmem:[%s4] sm:$0xf]
  %v549 = vld [vmem:[%s4 + $0x4] sm:$0xf]
  %v550 = vld [vmem:[%s4 + $0x8] sm:$0xf]
  %v551 = vld [vmem:[%s4 + $0xc] sm:$0xf]
  %v552 = vld [vmem:[%s4 + $0x10] sm:$0xf]
  %v553 = vld [vmem:[%s4 + $0x14] sm:$0xf]
  %v554 = vld [vmem:[%s4 + $0x18] sm:$0xf]
  %v555 = vld [vmem:[%s4 + $0x1c] sm:$0xf]
  %v556 = vld [vmem:[%s4 + $0x20] sm:$0xf]
  %v557 = vld [vmem:[%s4 + $0x24] sm:$0xf]
  %v558 = vld [vmem:[%s4 + $0x28] sm:$0xf]
  %v559 = vld [vmem:[%s4 + $0x2c] sm:$0xf]
  %v560 = vld [vmem:[%s4 + $0x30] sm:$0xf]
  %v561 = vld [vmem:[%s4 + $0x34] sm:$0xf]
  %v562 = vld [vmem:[%s4 + $0x38] sm:$0xf]
  %v563 = vld [vmem:[%s4 + $0x3c] sm:$0xf]
  %v564 = vld [vmem:[%s4 + $0x40] sm:$0xf]
  %v565 = vld [vmem:[%s4 + $0x44] sm:$0xf]
  %v566 = vld [vmem:[%s4 + $0x48] sm:$0xf]
  %v567 = vld [vmem:[%s4 + $0x4c] sm:$0xf]
  %v568 = vld [vmem:[%s4 + $0x50] sm:$0xf]
  %v569 = vld [vmem:[%s4 + $0x54] sm:$0xf]
  %v570 = vld [vmem:[%s4 + $0x58] sm:$0xf]
  %v571 = vld [vmem:[%s4 + $0x5c] sm:$0xf]
  %v572 = vld [vmem:[%s4 + $0x60] sm:$0xf]
  %v573 = vld [vmem:[%s4 + $0x64] sm:$0xf]
  %v574 = vld [vmem:[%s4 + $0x68] sm:$0xf]
  %v575 = vld [vmem:[%s4 + $0x6c] sm:$0xf]
  %v576 = vld [vmem:[%s4 + $0x70] sm:$0xf]
  %v577 = vld [vmem:[%s4 + $0x74] sm:$0xf]
  %v578 = vld [vmem:[%s4 + $0x78] sm:$0xf]
  %v579 = vld [vmem:[%s4 + $0x7c] sm:$0xf]
  %v580 = vld [vmem:[%s4 + $0x80] sm:$0xf]
  %v581 = vld [vmem:[%s4 + $0x84] sm:$0xf]
  %v582 = vld [vmem:[%s4 + $0x88] sm:$0xf]
  %v583 = vld [vmem:[%s4 + $0x8c] sm:$0xf]
  %v584 = vld [vmem:[%s4 + $0x90] sm:$0xf]
  %v585 = vld [vmem:[%s4 + $0x94] sm:$0xf]
  %v586 = vld [vmem:[%s4 + $0x98] sm:$0xf]
  %v587 = vld [vmem:[%s4 + $0x9c] sm:$0xf]
  %v588 = vld [vmem:[%s4 + $0xa0] sm:$0xf]
  %v589 = vld [vmem:[%s4 + $0xa4] sm:$0xf]
  %v590 = vld [vmem:[%s4 + $0xa8] sm:$0xf]
  %v591 = vld [vmem:[%s4 + $0xac] sm:$0xf]
  %v592 = vld [vmem:[%s4 + $0xb0] sm:$0xf]
  %v593 = vld [vmem:[%s4 + $0xb4] sm:$0xf]
  %v594 = vld [vmem:[%s4 + $0xb8] sm:$0xf]
  %v595 = vld [vmem:[%s4 + $0xbc] sm:$0xf]
  %v596 = vld [vmem:[%s4 + $0xc0] sm:$0xf]
  %v597 = vld [vmem:[%s4 + $0xc4] sm:$0xf]
  %v598 = vld [vmem:[%s5] sm:$0x1]
  %v600 = vperm.slane %v598, 0
  %v652 = vunpack.c.l.b16 %v548
  %v653 = vunpack.c.l.b16 %v549
  %v654 = vunpack.c.l.b16 %v550
  %v655 = vunpack.c.l.b16 %v551
  %v656 = vunpack.c.l.b16 %v552
  %v657 = vunpack.c.l.b16 %v553
  %v658 = vunpack.c.l.b16 %v554
  %v659 = vunpack.c.l.b16 %v555
  %v660 = vunpack.c.l.b16 %v556
  %v661 = vunpack.c.l.b16 %v557
  %v662 = vunpack.c.l.b16 %v558
  %v663 = vunpack.c.l.b16 %v559
  %v664 = vunpack.c.l.b16 %v560
  %v665 = vunpack.c.l.b16 %v561
  %v666 = vunpack.c.l.b16 %v562
  %v667 = vunpack.c.l.b16 %v563
  %v668 = vunpack.c.l.b16 %v564
  %v669 = vunpack.c.l.b16 %v565
  %v670 = vunpack.c.l.b16 %v566
  %v671 = vunpack.c.l.b16 %v567
  %v672 = vunpack.c.l.b16 %v568
  %v673 = vunpack.c.l.b16 %v569
  %v674 = vunpack.c.l.b16 %v570
  %v675 = vunpack.c.l.b16 %v571
  %v676 = vunpack.c.l.b16 %v572
  %v677 = vunpack.c.l.b16 %v573
  %v678 = vunpack.c.l.b16 %v574
  %v679 = vunpack.c.l.b16 %v575
  %v680 = vunpack.c.l.b16 %v576
  %v681 = vunpack.c.l.b16 %v577
  %v682 = vunpack.c.l.b16 %v578
  %v683 = vunpack.c.l.b16 %v579
  %v684 = vunpack.c.l.b16 %v580
  %v685 = vunpack.c.l.b16 %v581
  %v686 = vunpack.c.l.b16 %v582
  %v687 = vunpack.c.l.b16 %v583
  %v688 = vunpack.c.l.b16 %v584
  %v689 = vunpack.c.l.b16 %v585
  %v690 = vunpack.c.l.b16 %v586
  %v691 = vunpack.c.l.b16 %v587
  %v692 = vunpack.c.l.b16 %v588
  %v693 = vunpack.c.l.b16 %v589
  %v694 = vunpack.c.l.b16 %v590
  %v695 = vunpack.c.l.b16 %v591
  %v696 = vunpack.c.l.b16 %v592
  %v697 = vunpack.c.l.b16 %v593
  %v698 = vunpack.c.l.b16 %v594
  %v699 = vunpack.c.l.b16 %v595
  %v700 = vunpack.c.l.b16 %v596
  %v701 = vunpack.c.l.b16 %v597
  %v702 = vpack.c.b16 %v653, %v652
  %v703 = vpack.c.b16 %v655, %v654
  %v704 = vpack.c.b16 %v657, %v656
  %v705 = vpack.c.b16 %v659, %v658
  %v706 = vpack.c.b16 %v661, %v660
  %v707 = vpack.c.b16 %v663, %v662
  %v708 = vpack.c.b16 %v665, %v664
  %v709 = vpack.c.b16 %v667, %v666
  %v710 = vpack.c.b16 %v669, %v668
  %v711 = vpack.c.b16 %v671, %v670
  %v712 = vpack.c.b16 %v673, %v672
  %v713 = vpack.c.b16 %v675, %v674
  %v714 = vpack.c.b16 %v677, %v676
  %v715 = vpack.c.b16 %v679, %v678
  %v716 = vpack.c.b16 %v681, %v680
  %v717 = vpack.c.b16 %v683, %v682
  %v718 = vpack.c.b16 %v685, %v684
  %v719 = vpack.c.b16 %v687, %v686
  %v720 = vpack.c.b16 %v689, %v688
  %v721 = vpack.c.b16 %v691, %v690
  %v722 = vpack.c.b16 %v693, %v692
  %v723 = vpack.c.b16 %v695, %v694
  %v724 = vpack.c.b16 %v697, %v696
  %v725 = vpack.c.b16 %v699, %v698
  %v726 = vpack.c.b16 %v701, %v700
  %vm752 = vcmask 130048
  %v754 = vsel %vm752, %v547, 0
  %756 = vmatpush.bf16.msra.mxu0 %v709
  %757 = vmatpush.bf16.msra.mxu0 %v708
  %758 = vmatpush.bf16.msra.mxu0 %v707
  %759 = vmatpush.bf16.msra.mxu0 %v706
  %760 = vmatpush.bf16.msra.mxu0 %v705
  %761 = vmatpush.bf16.msra.mxu0 %v704
  %762 = vmatpush.bf16.msra.mxu0 %v703
  %763 = vmatpush.bf16.msra.mxu0 %v702
  %764 = vmatmul.bf16.gmra.mxu0 %v544
  %v765 = vpop.f32.mrf.mxu0
  %v766 = vadd.f32 %v600, %v765
  %v767 = vpop.f32.mrf.mxu0
  %768 = vdwg.mxu0
  %769 = vmatpush.bf16.msra.mxu0 %v717
  %770 = vmatpush.bf16.msra.mxu0 %v716
  %771 = vmatpush.bf16.msra.mxu0 %v715
  %772 = vmatpush.bf16.msra.mxu0 %v714
  %773 = vmatpush.bf16.msra.mxu0 %v713
  %774 = vmatpush.bf16.msra.mxu0 %v712
  %775 = vmatpush.bf16.msra.mxu0 %v711
  %776 = vmatpush.bf16.msra.mxu0 %v710
  %777 = vmatmul.bf16.gmra.mxu0 %v545
  %v778 = vpop.f32.mrf.mxu0
  %v779 = vadd.f32 %v766, %v778
  %v780 = vpop.f32.mrf.mxu0
  %781 = vdwg.mxu0
  %782 = vmatpush.bf16.msra.mxu0 %v725
  %783 = vmatpush.bf16.msra.mxu0 %v724
  %784 = vmatpush.bf16.msra.mxu0 %v723
  %785 = vmatpush.bf16.msra.mxu0 %v722
  %786 = vmatpush.bf16.msra.mxu0 %v721
  %787 = vmatpush.bf16.msra.mxu0 %v720
  %788 = vmatpush.bf16.msra.mxu0 %v719
  %789 = vmatpush.bf16.msra.mxu0 %v718
  %790 = vmatmul.bf16.gmra.mxu0 %v546
  %v791 = vpop.f32.mrf.mxu0
  %v792 = vadd.f32 %v779, %v791
  %v793 = vpop.f32.mrf.mxu0
  %794 = vdwg.mxu0
  %795 = vmatpush.bf16.msra.mxu0 0
  %796 = vmatpush.bf16.msra.mxu0 0
  %797 = vmatpush.bf16.msra.mxu0 0
  %798 = vmatpush.bf16.msra.mxu0 0
  %799 = vmatpush.bf16.msra.mxu0 0
  %800 = vmatpush.bf16.msra.mxu0 0
  %801 = vmatpush.bf16.msra.mxu0 0
  %802 = vmatpush.bf16.msra.mxu0 %v726
  %803 = vmatmul.bf16.gmra.mxu0 %v754
  %v804 = vpop.f32.mrf.mxu0
  %v805 = vadd.f32 %v792, %v804
  %v806 = vpop.f32.mrf.mxu0
  %807 = vdwg.mxu0
  %v808 = vmul.f32 %v805, 1.442695
  %v809 = vpow.pop %v808
  %v810 = vmul.f32 %v805, %v805
  %v811 = vmul.f32 %v809, %v809
  %813 = vrot.lane.b32.xlu0 %v811, 120
  %v814 = vpop.permute.xlu0 %813
  %v816 = vadd.f32 %v810, %v814
  %v817 = vsub.f32 %v816, 1.0
  %819 = vrot.lane.b32.xlu0 %v805, 120
  %v820 = vpop.permute.xlu0 %819
  %v822 = vsub.f32 %v817, %v820
  %vm823 = vcmask 64512
  %v824 = vsel %vm823, %v822, 0.0
  %825 = vadd.xlane.f32.xlu0 %v824
  %v826 = vpop.xlane.xlu0 %825
  %v827 = vmul.f32 %v826, 0.5
  %vm828 = vcmask 7168
  %829 = vst.msk [vmem:[%s11] sm:$0xff] %vm828, %v827
  %v830 = vmul.f32 %v805, 0.5
  %v831 = vmul.f32 %v830, 1.442695
  %v832 = vpow.pop %v831
  %v833 = vld [vmem:[%s1] sm:$0xff]
  %835 = vrot.lane.b32.xlu0 %v832, 120
  %v836 = vpop.permute.xlu0 %835
  %v838 = vmul.f32 %v833, %v836
  %v839 = vadd.f32 %v805, %v838
  %v840 = vpack.c.bf16 %v839, %v839
  %v841 = vld [vmem:[%s6] sm:$0xff]
  %v842 = vld [vmem:[%s6 + $0x8] sm:$0xff]
  %v843 = vld [vmem:[%s7] sm:$0xf]
  %v845 = vperm.slane %v843, 0
  %v846 = vperm.slane %v843, 1
  %v847 = vperm.slane %v843, 2
  %v848 = vperm.slane %v843, 3
  %v855 = vunpack.c.l.b16 %v841
  %v856 = vunpack.c.h.b16 %v841
  %v857 = vunpack.c.l.b16 %v842
  %v858 = vunpack.c.h.b16 %v842
  %v859 = vpack.c.b16 %v855, %v855
  %v860 = vpack.c.b16 %v856, %v856
  %v861 = vpack.c.b16 %v857, %v857
  %v862 = vpack.c.b16 %v858, %v858
  %v864 = vsel %vm823, %v840, 0
  %vm866 = vcmask 1043456
  %v868 = vsel %vm866, %v859, 0
  %v871 = vsel %vm866, %v860, 0
  %v874 = vsel %vm866, %v861, 0
  %v877 = vsel %vm866, %v862, 0
  %879 = vmatpush.bf16.msra.mxu0 0
  %880 = vmatpush.bf16.msra.mxu0 0
  %881 = vmatpush.bf16.msra.mxu0 0
  %882 = vmatpush.bf16.msra.mxu0 0
  %883 = vmatpush.bf16.msra.mxu0 0
  %884 = vmatpush.bf16.msra.mxu0 0
  %885 = vmatpush.bf16.msra.mxu0 0
  %886 = vmatpush.bf16.msra.mxu0 %v868
  %887 = vmatmul.bf16.gmra.mxu0 %v864
  %v888 = vpop.f32.mrf.mxu0
  %v889 = vadd.f32 %v845, %v888
  %v890 = vpop.f32.mrf.mxu0
  %891 = vdwg.mxu0
  %892 = vmatpush.bf16.msra.mxu0 0
  %893 = vmatpush.bf16.msra.mxu0 0
  %894 = vmatpush.bf16.msra.mxu0 0
  %895 = vmatpush.bf16.msra.mxu0 0
  %896 = vmatpush.bf16.msra.mxu0 0
  %897 = vmatpush.bf16.msra.mxu0 0
  %898 = vmatpush.bf16.msra.mxu0 0
  %899 = vmatpush.bf16.msra.mxu0 %v871
  %900 = vmatmul.bf16.gmra.mxu0 %v864
  %v901 = vpop.f32.mrf.mxu0
  %v902 = vadd.f32 %v846, %v901
  %v903 = vpop.f32.mrf.mxu0
  %904 = vdwg.mxu0
  %905 = vmatpush.bf16.msra.mxu0 0
  %906 = vmatpush.bf16.msra.mxu0 0
  %907 = vmatpush.bf16.msra.mxu0 0
  %908 = vmatpush.bf16.msra.mxu0 0
  %909 = vmatpush.bf16.msra.mxu0 0
  %910 = vmatpush.bf16.msra.mxu0 0
  %911 = vmatpush.bf16.msra.mxu0 0
  %912 = vmatpush.bf16.msra.mxu0 %v874
  %913 = vmatmul.bf16.gmra.mxu0 %v864
  %v914 = vpop.f32.mrf.mxu0
  %v915 = vadd.f32 %v847, %v914
  %v916 = vpop.f32.mrf.mxu0
  %917 = vdwg.mxu0
  %918 = vmatpush.bf16.msra.mxu0 0
  %919 = vmatpush.bf16.msra.mxu0 0
  %920 = vmatpush.bf16.msra.mxu0 0
  %921 = vmatpush.bf16.msra.mxu0 0
  %922 = vmatpush.bf16.msra.mxu0 0
  %923 = vmatpush.bf16.msra.mxu0 0
  %924 = vmatpush.bf16.msra.mxu0 0
  %925 = vmatpush.bf16.msra.mxu0 %v877
  %926 = vmatmul.bf16.gmra.mxu0 %v864
  %v927 = vpop.f32.mrf.mxu0
  %v928 = vadd.f32 %v848, %v927
  %v929 = vpop.f32.mrf.mxu0
  %930 = vdwg.mxu0
  %v931 = vmax.f32 %v889, 0.0
  %v932 = vmax.f32 %v902, 0.0
  %v933 = vmax.f32 %v915, 0.0
  %v934 = vmax.f32 %v928, 0.0
  %v935 = vpack.c.bf16 %v931, %v931
  %v936 = vpack.c.bf16 %v932, %v932
  %v937 = vpack.c.bf16 %v933, %v933
  %v938 = vpack.c.bf16 %v934, %v934
  %v939 = vld [vmem:[%s8] sm:$0xff]
  %v940 = vld [vmem:[%s8 + $0x8] sm:$0xff]
  %v941 = vld [vmem:[%s8 + $0x10] sm:$0xff]
  %v942 = vld [vmem:[%s8 + $0x18] sm:$0xff]
  %v943 = vld [vmem:[%s8 + $0x20] sm:$0xff]
  %v944 = vld [vmem:[%s8 + $0x28] sm:$0xff]
  %v945 = vld [vmem:[%s8 + $0x30] sm:$0xff]
  %v946 = vld [vmem:[%s8 + $0x38] sm:$0xff]
  %v947 = vld [vmem:[%s8 + $0x40] sm:$0xff]
  %v948 = vld [vmem:[%s8 + $0x48] sm:$0xff]
  %v949 = vld [vmem:[%s8 + $0x50] sm:$0xff]
  %v950 = vld [vmem:[%s8 + $0x58] sm:$0xff]
  %v951 = vld [vmem:[%s8 + $0x60] sm:$0xff]
  %v952 = vld [vmem:[%s8 + $0x68] sm:$0xff]
  %v953 = vld [vmem:[%s8 + $0x70] sm:$0xff]
  %v954 = vld [vmem:[%s8 + $0x78] sm:$0xff]
  %v955 = vld [vmem:[%s8 + $0x80] sm:$0xff]
  %v956 = vld [vmem:[%s8 + $0x88] sm:$0xff]
  %v957 = vld [vmem:[%s8 + $0x90] sm:$0xff]
  %v958 = vld [vmem:[%s8 + $0x98] sm:$0xff]
  %v959 = vld [vmem:[%s8 + $0xa0] sm:$0xff]
  %v960 = vld [vmem:[%s8 + $0xa8] sm:$0xff]
  %v961 = vld [vmem:[%s8 + $0xb0] sm:$0xff]
  %v962 = vld [vmem:[%s8 + $0xb8] sm:$0xff]
  %v963 = vld [vmem:[%s8 + $0xc0] sm:$0xff]
  %v964 = vld [vmem:[%s8 + $0xc8] sm:$0xff]
  %v965 = vld [vmem:[%s8 + $0xd0] sm:$0xff]
  %v966 = vld [vmem:[%s8 + $0xd8] sm:$0xff]
  %v967 = vld [vmem:[%s8 + $0xe0] sm:$0xff]
  %v968 = vld [vmem:[%s8 + $0xe8] sm:$0xff]
  %v969 = vld [vmem:[%s8 + $0xf0] sm:$0xff]
  %v970 = vld [vmem:[%s8 + $0xf8] sm:$0xff]
  %v971 = vld [vmem:[%s8 + $0x100] sm:$0xff]
  %v972 = vld [vmem:[%s8 + $0x108] sm:$0xff]
  %v973 = vld [vmem:[%s8 + $0x110] sm:$0xff]
  %v974 = vld [vmem:[%s8 + $0x118] sm:$0xff]
  %v975 = vld [vmem:[%s8 + $0x120] sm:$0xff]
  %v976 = vld [vmem:[%s8 + $0x128] sm:$0xff]
  %v977 = vld [vmem:[%s8 + $0x130] sm:$0xff]
  %v978 = vld [vmem:[%s8 + $0x138] sm:$0xff]
  %v979 = vld [vmem:[%s8 + $0x140] sm:$0xff]
  %v980 = vld [vmem:[%s8 + $0x148] sm:$0xff]
  %v981 = vld [vmem:[%s8 + $0x150] sm:$0xff]
  %v982 = vld [vmem:[%s8 + $0x158] sm:$0xff]
  %v983 = vld [vmem:[%s8 + $0x160] sm:$0xff]
  %v984 = vld [vmem:[%s8 + $0x168] sm:$0xff]
  %v985 = vld [vmem:[%s8 + $0x170] sm:$0xff]
  %v986 = vld [vmem:[%s8 + $0x178] sm:$0xff]
  %v987 = vld [vmem:[%s8 + $0x180] sm:$0xff]
  %v988 = vld [vmem:[%s8 + $0x188] sm:$0xff]
  %v989 = vld [vmem:[%s9] sm:$0x3]
  %v991 = vperm.slane %v989, 0
  %v992 = vperm.slane %v989, 1
  %v1045 = vunpack.c.l.b16 %v939
  %v1046 = vunpack.c.h.b16 %v939
  %v1047 = vunpack.c.l.b16 %v940
  %v1048 = vunpack.c.h.b16 %v940
  %v1049 = vunpack.c.l.b16 %v941
  %v1050 = vunpack.c.h.b16 %v941
  %v1051 = vunpack.c.l.b16 %v942
  %v1052 = vunpack.c.h.b16 %v942
  %v1053 = vunpack.c.l.b16 %v943
  %v1054 = vunpack.c.h.b16 %v943
  %v1055 = vunpack.c.l.b16 %v944
  %v1056 = vunpack.c.h.b16 %v944
  %v1057 = vunpack.c.l.b16 %v945
  %v1058 = vunpack.c.h.b16 %v945
  %v1059 = vunpack.c.l.b16 %v946
  %v1060 = vunpack.c.h.b16 %v946
  %v1061 = vunpack.c.l.b16 %v947
  %v1062 = vunpack.c.h.b16 %v947
  %v1063 = vunpack.c.l.b16 %v948
  %v1064 = vunpack.c.h.b16 %v948
  %v1065 = vunpack.c.l.b16 %v949
  %v1066 = vunpack.c.h.b16 %v949
  %v1067 = vunpack.c.l.b16 %v950
  %v1068 = vunpack.c.h.b16 %v950
  %v1069 = vunpack.c.l.b16 %v951
  %v1070 = vunpack.c.h.b16 %v951
  %v1071 = vunpack.c.l.b16 %v952
  %v1072 = vunpack.c.h.b16 %v952
  %v1073 = vunpack.c.l.b16 %v953
  %v1074 = vunpack.c.h.b16 %v953
  %v1075 = vunpack.c.l.b16 %v954
  %v1076 = vunpack.c.h.b16 %v954
  %v1077 = vunpack.c.l.b16 %v955
  %v1078 = vunpack.c.h.b16 %v955
  %v1079 = vunpack.c.l.b16 %v956
  %v1080 = vunpack.c.h.b16 %v956
  %v1081 = vunpack.c.l.b16 %v957
  %v1082 = vunpack.c.h.b16 %v957
  %v1083 = vunpack.c.l.b16 %v958
  %v1084 = vunpack.c.h.b16 %v958
  %v1085 = vunpack.c.l.b16 %v959
  %v1086 = vunpack.c.h.b16 %v959
  %v1087 = vunpack.c.l.b16 %v960
  %v1088 = vunpack.c.h.b16 %v960
  %v1089 = vunpack.c.l.b16 %v961
  %v1090 = vunpack.c.h.b16 %v961
  %v1091 = vunpack.c.l.b16 %v962
  %v1092 = vunpack.c.h.b16 %v962
  %v1093 = vunpack.c.l.b16 %v963
  %v1094 = vunpack.c.h.b16 %v963
  %v1095 = vunpack.c.l.b16 %v964
  %v1096 = vunpack.c.h.b16 %v964
  %v1097 = vunpack.c.l.b16 %v965
  %v1098 = vunpack.c.h.b16 %v965
  %v1099 = vunpack.c.l.b16 %v966
  %v1100 = vunpack.c.h.b16 %v966
  %v1101 = vunpack.c.l.b16 %v967
  %v1102 = vunpack.c.h.b16 %v967
  %v1103 = vunpack.c.l.b16 %v968
  %v1104 = vunpack.c.h.b16 %v968
  %v1105 = vunpack.c.l.b16 %v969
  %v1106 = vunpack.c.h.b16 %v969
  %v1107 = vunpack.c.l.b16 %v970
  %v1108 = vunpack.c.h.b16 %v970
  %v1109 = vunpack.c.l.b16 %v971
  %v1110 = vunpack.c.h.b16 %v971
  %v1111 = vunpack.c.l.b16 %v972
  %v1112 = vunpack.c.h.b16 %v972
  %v1113 = vunpack.c.l.b16 %v973
  %v1114 = vunpack.c.h.b16 %v973
  %v1115 = vunpack.c.l.b16 %v974
  %v1116 = vunpack.c.h.b16 %v974
  %v1117 = vunpack.c.l.b16 %v975
  %v1118 = vunpack.c.h.b16 %v975
  %v1119 = vunpack.c.l.b16 %v976
  %v1120 = vunpack.c.h.b16 %v976
  %v1121 = vunpack.c.l.b16 %v977
  %v1122 = vunpack.c.h.b16 %v977
  %v1123 = vunpack.c.l.b16 %v978
  %v1124 = vunpack.c.h.b16 %v978
  %v1125 = vunpack.c.l.b16 %v979
  %v1126 = vunpack.c.h.b16 %v979
  %v1127 = vunpack.c.l.b16 %v980
  %v1128 = vunpack.c.h.b16 %v980
  %v1129 = vunpack.c.l.b16 %v981
  %v1130 = vunpack.c.h.b16 %v981
  %v1131 = vunpack.c.l.b16 %v982
  %v1132 = vunpack.c.h.b16 %v982
  %v1133 = vunpack.c.l.b16 %v983
  %v1134 = vunpack.c.h.b16 %v983
  %v1135 = vunpack.c.l.b16 %v984
  %v1136 = vunpack.c.h.b16 %v984
  %v1137 = vunpack.c.l.b16 %v985
  %v1138 = vunpack.c.h.b16 %v985
  %v1139 = vunpack.c.l.b16 %v986
  %v1140 = vunpack.c.h.b16 %v986
  %v1141 = vunpack.c.l.b16 %v987
  %v1142 = vunpack.c.h.b16 %v987
  %v1143 = vunpack.c.l.b16 %v988
  %v1144 = vunpack.c.h.b16 %v988
  %v1145 = vpack.c.b16 %v1047, %v1045
  %v1146 = vpack.c.b16 %v1048, %v1046
  %v1147 = vpack.c.b16 %v1051, %v1049
  %v1148 = vpack.c.b16 %v1052, %v1050
  %v1149 = vpack.c.b16 %v1055, %v1053
  %v1150 = vpack.c.b16 %v1056, %v1054
  %v1151 = vpack.c.b16 %v1059, %v1057
  %v1152 = vpack.c.b16 %v1060, %v1058
  %v1153 = vpack.c.b16 %v1063, %v1061
  %v1154 = vpack.c.b16 %v1064, %v1062
  %v1155 = vpack.c.b16 %v1067, %v1065
  %v1156 = vpack.c.b16 %v1068, %v1066
  %v1157 = vpack.c.b16 %v1071, %v1069
  %v1158 = vpack.c.b16 %v1072, %v1070
  %v1159 = vpack.c.b16 %v1075, %v1073
  %v1160 = vpack.c.b16 %v1076, %v1074
  %v1161 = vpack.c.b16 %v1079, %v1077
  %v1162 = vpack.c.b16 %v1080, %v1078
  %v1163 = vpack.c.b16 %v1083, %v1081
  %v1164 = vpack.c.b16 %v1084, %v1082
  %v1165 = vpack.c.b16 %v1087, %v1085
  %v1166 = vpack.c.b16 %v1088, %v1086
  %v1167 = vpack.c.b16 %v1091, %v1089
  %v1168 = vpack.c.b16 %v1092, %v1090
  %v1169 = vpack.c.b16 %v1095, %v1093
  %v1170 = vpack.c.b16 %v1096, %v1094
  %v1171 = vpack.c.b16 %v1099, %v1097
  %v1172 = vpack.c.b16 %v1100, %v1098
  %v1173 = vpack.c.b16 %v1103, %v1101
  %v1174 = vpack.c.b16 %v1104, %v1102
  %v1175 = vpack.c.b16 %v1107, %v1105
  %v1176 = vpack.c.b16 %v1108, %v1106
  %v1177 = vpack.c.b16 %v1111, %v1109
  %v1178 = vpack.c.b16 %v1112, %v1110
  %v1179 = vpack.c.b16 %v1115, %v1113
  %v1180 = vpack.c.b16 %v1116, %v1114
  %v1181 = vpack.c.b16 %v1119, %v1117
  %v1182 = vpack.c.b16 %v1120, %v1118
  %v1183 = vpack.c.b16 %v1123, %v1121
  %v1184 = vpack.c.b16 %v1124, %v1122
  %v1185 = vpack.c.b16 %v1127, %v1125
  %v1186 = vpack.c.b16 %v1128, %v1126
  %v1187 = vpack.c.b16 %v1131, %v1129
  %v1188 = vpack.c.b16 %v1132, %v1130
  %v1189 = vpack.c.b16 %v1135, %v1133
  %v1190 = vpack.c.b16 %v1136, %v1134
  %v1191 = vpack.c.b16 %v1139, %v1137
  %v1192 = vpack.c.b16 %v1140, %v1138
  %v1193 = vpack.c.b16 %v1143, %v1141
  %v1194 = vpack.c.b16 %v1144, %v1142
  %v1246 = vsel %vm752, %v938, 0
  %1248 = vmatpush.bf16.msra.mxu0 %v1159
  %1249 = vmatpush.bf16.msra.mxu0 %v1157
  %1250 = vmatpush.bf16.msra.mxu0 %v1155
  %1251 = vmatpush.bf16.msra.mxu0 %v1153
  %1252 = vmatpush.bf16.msra.mxu0 %v1151
  %1253 = vmatpush.bf16.msra.mxu0 %v1149
  %1254 = vmatpush.bf16.msra.mxu0 %v1147
  %1255 = vmatpush.bf16.msra.mxu0 %v1145
  %1256 = vmatmul.bf16.gmra.mxu0 %v935
  %v1257 = vpop.f32.mrf.mxu0
  %v1258 = vadd.f32 %v991, %v1257
  %v1259 = vpop.f32.mrf.mxu0
  %1260 = vdwg.mxu0
  %1261 = vmatpush.bf16.msra.mxu0 %v1175
  %1262 = vmatpush.bf16.msra.mxu0 %v1173
  %1263 = vmatpush.bf16.msra.mxu0 %v1171
  %1264 = vmatpush.bf16.msra.mxu0 %v1169
  %1265 = vmatpush.bf16.msra.mxu0 %v1167
  %1266 = vmatpush.bf16.msra.mxu0 %v1165
  %1267 = vmatpush.bf16.msra.mxu0 %v1163
  %1268 = vmatpush.bf16.msra.mxu0 %v1161
  %1269 = vmatmul.bf16.gmra.mxu0 %v936
  %v1270 = vpop.f32.mrf.mxu0
  %v1271 = vadd.f32 %v1258, %v1270
  %v1272 = vpop.f32.mrf.mxu0
  %1273 = vdwg.mxu0
  %1274 = vmatpush.bf16.msra.mxu0 %v1191
  %1275 = vmatpush.bf16.msra.mxu0 %v1189
  %1276 = vmatpush.bf16.msra.mxu0 %v1187
  %1277 = vmatpush.bf16.msra.mxu0 %v1185
  %1278 = vmatpush.bf16.msra.mxu0 %v1183
  %1279 = vmatpush.bf16.msra.mxu0 %v1181
  %1280 = vmatpush.bf16.msra.mxu0 %v1179
  %1281 = vmatpush.bf16.msra.mxu0 %v1177
  %1282 = vmatmul.bf16.gmra.mxu0 %v937
  %v1283 = vpop.f32.mrf.mxu0
  %v1284 = vadd.f32 %v1271, %v1283
  %v1285 = vpop.f32.mrf.mxu0
  %1286 = vdwg.mxu0
  %1287 = vmatpush.bf16.msra.mxu0 0
  %1288 = vmatpush.bf16.msra.mxu0 0
  %1289 = vmatpush.bf16.msra.mxu0 0
  %1290 = vmatpush.bf16.msra.mxu0 0
  %1291 = vmatpush.bf16.msra.mxu0 0
  %1292 = vmatpush.bf16.msra.mxu0 0
  %1293 = vmatpush.bf16.msra.mxu0 0
  %1294 = vmatpush.bf16.msra.mxu0 %v1193
  %1295 = vmatmul.bf16.gmra.mxu0 %v1246
  %v1296 = vpop.f32.mrf.mxu0
  %v1297 = vadd.f32 %v1284, %v1296
  %v1298 = vpop.f32.mrf.mxu0
  %1299 = vdwg.mxu0
  %1300 = vmatpush.bf16.msra.mxu0 %v1160
  %1301 = vmatpush.bf16.msra.mxu0 %v1158
  %1302 = vmatpush.bf16.msra.mxu0 %v1156
  %1303 = vmatpush.bf16.msra.mxu0 %v1154
  %1304 = vmatpush.bf16.msra.mxu0 %v1152
  %1305 = vmatpush.bf16.msra.mxu0 %v1150
  %1306 = vmatpush.bf16.msra.mxu0 %v1148
  %1307 = vmatpush.bf16.msra.mxu0 %v1146
  %1308 = vmatmul.bf16.gmra.mxu0 %v935
  %v1309 = vpop.f32.mrf.mxu0
  %v1310 = vadd.f32 %v992, %v1309
  %v1311 = vpop.f32.mrf.mxu0
  %1312 = vdwg.mxu0
  %1313 = vmatpush.bf16.msra.mxu0 %v1176
  %1314 = vmatpush.bf16.msra.mxu0 %v1174
  %1315 = vmatpush.bf16.msra.mxu0 %v1172
  %1316 = vmatpush.bf16.msra.mxu0 %v1170
  %1317 = vmatpush.bf16.msra.mxu0 %v1168
  %1318 = vmatpush.bf16.msra.mxu0 %v1166
  %1319 = vmatpush.bf16.msra.mxu0 %v1164
  %1320 = vmatpush.bf16.msra.mxu0 %v1162
  %1321 = vmatmul.bf16.gmra.mxu0 %v936
  %v1322 = vpop.f32.mrf.mxu0
  %v1323 = vadd.f32 %v1310, %v1322
  %v1324 = vpop.f32.mrf.mxu0
  %1325 = vdwg.mxu0
  %1326 = vmatpush.bf16.msra.mxu0 %v1192
  %1327 = vmatpush.bf16.msra.mxu0 %v1190
  %1328 = vmatpush.bf16.msra.mxu0 %v1188
  %1329 = vmatpush.bf16.msra.mxu0 %v1186
  %1330 = vmatpush.bf16.msra.mxu0 %v1184
  %1331 = vmatpush.bf16.msra.mxu0 %v1182
  %1332 = vmatpush.bf16.msra.mxu0 %v1180
  %1333 = vmatpush.bf16.msra.mxu0 %v1178
  %1334 = vmatmul.bf16.gmra.mxu0 %v937
  %v1335 = vpop.f32.mrf.mxu0
  %v1336 = vadd.f32 %v1323, %v1335
  %v1337 = vpop.f32.mrf.mxu0
  %1338 = vdwg.mxu0
  %1339 = vmatpush.bf16.msra.mxu0 0
  %1340 = vmatpush.bf16.msra.mxu0 0
  %1341 = vmatpush.bf16.msra.mxu0 0
  %1342 = vmatpush.bf16.msra.mxu0 0
  %1343 = vmatpush.bf16.msra.mxu0 0
  %1344 = vmatpush.bf16.msra.mxu0 0
  %1345 = vmatpush.bf16.msra.mxu0 0
  %1346 = vmatpush.bf16.msra.mxu0 %v1194
  %1347 = vmatmul.bf16.gmra.mxu0 %v1246
  %v1348 = vpop.f32.mrf.mxu0
  %v1349 = vadd.f32 %v1336, %v1348
  %v1350 = vpop.f32.mrf.mxu0
  %1351 = vdwg.mxu0
  %v1352 = vxor.u32 %v1297, 2147483648
  %v1353 = vxor.u32 %v1349, 2147483648
  %v1354 = vmul.f32 %v1352, 1.442695
  %v1355 = vpow.pop %v1354
  %v1356 = vmul.f32 %v1353, 1.442695
  %v1357 = vpow.pop %v1356
  %v1358 = vadd.f32 %v1355, 1.0
  %v1359 = vadd.f32 %v1357, 1.0
  %v1360 = vrcp.pop %v1358
  %v1361 = vmul.f32 %v1358, %v1360
  %v1362 = vsub.f32 1.0, %v1361
  %v1363 = vmul.f32 %v1360, %v1362
  %v1364 = vadd.f32 %v1360, %v1363
  %vm1365 = vweird.f32 %v1358
  %vm1366 = vweird.f32 %v1360
  %vm1367 = vmor %vm1365, %vm1366
  %v1368 = vsel %vm1367, %v1360, %v1364
  %v1369 = vand.u32 2147483647, %v1358
  %vm1370 = vcmp.eq.f32.partialorder %v1369, 8.507059e+37
  %v1371 = vand.u32 %v1358, 2147483648
  %v1372 = vor.u32 1.1754944e-38, %v1371
  %v1373 = vsel %vm1370, %v1372, %v1368
  %v1374 = vmul.f32 1.0, %v1373
  %v1375 = vrcp.pop %v1359
  %v1376 = vmul.f32 %v1359, %v1375
  %v1377 = vsub.f32 1.0, %v1376
  %v1378 = vmul.f32 %v1375, %v1377
  %v1379 = vadd.f32 %v1375, %v1378
  %vm1380 = vweird.f32 %v1359
  %vm1381 = vweird.f32 %v1375
  %vm1382 = vmor %vm1380, %vm1381
  %v1383 = vsel %vm1382, %v1375, %v1379
  %v1384 = vand.u32 2147483647, %v1359
  %vm1385 = vcmp.eq.f32.partialorder %v1384, 8.507059e+37
  %v1386 = vand.u32 %v1359, 2147483648
  %v1387 = vor.u32 1.1754944e-38, %v1386
  %v1388 = vsel %vm1385, %v1387, %v1383
  %v1389 = vmul.f32 1.0, %v1388
  %1390 = vst [vmem:[%s10] sm:$0xff] %v1374
  %1391 = vst [vmem:[%s10 + $0x8] sm:$0xff] %v1389
  // Predicated region
  $region42: #{vae_forward.1} parent=0 // pred_check
    _
  $region43: #{vae_forward.1} parent=0 // pred_check_branch
    %1393 = sbr.rel (0) target = $region45
  $region44: #{vae_forward.1} parent=0 // pred_region
    _
  $region45: #{vae_forward.1} parent=0 // pred_fallthru
    _
  // Predicated region
  $region46: #{vae_forward.1} parent=0 // pred_check
    _
  $region47: #{vae_forward.1} parent=0 // pred_check_branch
    %1395 = sbr.rel (0) target = $region49
  $region48: #{vae_forward.1} parent=0 // pred_region
    _
  $region49: #{vae_forward.1} parent=0 // pred_fallthru
    _
  // Predicated region
  $region50: #{vae_forward.1} parent=0 // pred_check
    _
  $region51: #{vae_forward.1} parent=0 // pred_check_branch
    %1397 = sbr.rel (0) target = $region53
  $region52: #{vae_forward.1} parent=0 // pred_region
    _
  $region53: #{vae_forward.1} parent=0 // pred_fallthru
    _
  // Predicated region
  $region54: #{vae_forward.1} parent=0 // pred_check
    _
  $region55: #{vae_forward.1} parent=0 // pred_check_branch
    %1399 = sbr.rel (0) target = $region57
  $region56: #{vae_forward.1} parent=0 // pred_region
    _
  $region57: #{vae_forward.1} parent=0 // pred_fallthru
    _

</llo_original>
